<compile_context>
chip_gen: v7x
topology: tpu7x:2x2x1
jax: 0.10.0
libtpu: 0.0.40
codegen_flags: <defaults>
</compile_context>

<pallas_src>
import functools

import jax
import jax.numpy as jnp
from jax.experimental import pallas as pl
from jax.experimental.pallas import tpu as pltpu

_SQRT_2_OVER_PI = 0.7978845608028654  # sqrt(2 / pi)
_CUBIC_COEF = 0.044715


# ----------------------------------------------------------------------------
# Pallas kernel: element-wise tanh-GELU on a lane-dense (block_rows, 128) tile
# ----------------------------------------------------------------------------
def _gelu_kernel(x_ref, o_ref, *, compute_dtype):
    x = x_ref[...].astype(compute_dtype)
    # tanh goes to the EUP slot; the remaining muls/adds are plain VALU work.
    inner = _SQRT_2_OVER_PI * (x + _CUBIC_COEF * (x * x * x))
    y = 0.5 * x * (1.0 + jnp.tanh(inner))
    o_ref[...] = y.astype(o_ref.dtype)


# ----------------------------------------------------------------------------
# Wrapper: flatten to a lane-dense (rows, 128) slab, tile rows, unpack.
# ----------------------------------------------------------------------------
def gelu_forward(x, *, target_block_bytes=4 * 1024 * 1024):
    orig_shape = x.shape
    orig_dtype = x.dtype
    n = x.size
    if n == 0:
        return x

    LANE = 128  # last dim exactly 128 -> fully populated vregs, unmasked vst

    # bf16 is evaluated natively (bf16 VPU/EUP on v6e/v7x, halves vreg
    # pressure); everything else uses the f32 path (v5e has no bf16 VALU/EUP,
    # and f32 input stays f32 => bit-matches the PyTorch formula).
    if jnp.dtype(orig_dtype) == jnp.dtype(jnp.bfloat16):
        compute_dtype = jnp.bfloat16
        sublane = 16  # bf16 packs (16, 128) per vreg
    else:
        compute_dtype = jnp.float32
        sublane = 8

    itemsize = jnp.dtype(orig_dtype).itemsize
    tile_elems = sublane * LANE

    # Minimal padding: only up to the next (sublane, 128) tile boundary, and
    # only when the element count does not already land on one.
    n_pad = pl.cdiv(n, tile_elems) * tile_elems
    padded = n_pad != n
    x_flat = jnp.ravel(x)
    if padded:
        # GELU(0) == 0, so zero padding is harmless and sliced off afterwards.
        x_flat = jnp.pad(x_flat, (0, n_pad - n))
    rows = n_pad // LANE
    x2d = x_flat.reshape(rows, LANE)

    # Block sizing: ~4 MiB per block (8192 rows f32 / 16384 rows bf16).
    # With input + output double-buffered that is <= 16 MiB of VMEM.
    block_rows_cap = max(
        sublane, (target_block_bytes // (LANE * itemsize) // sublane) * sublane)
    block_rows = min(block_rows_cap, rows)

    # Keep >= 4 grid steps for non-tiny inputs so the parallel axis can shard
    # across both v7x TensorCores and the DMA pipeline stays busy.
    min_steps = 4
    if rows > sublane * min_steps and pl.cdiv(rows, block_rows) < min_steps:
        block_rows = max(
            sublane, pl.cdiv(pl.cdiv(rows, min_steps), sublane) * sublane)

    grid = (pl.cdiv(rows, block_rows),)  # ragged last block handled by Pallas

    kernel = functools.partial(_gelu_kernel, compute_dtype=compute_dtype)

    # Note: if the caller can donate x, `input_output_aliases={0: 0}` would
    # also drop the extra HBM output allocation; left off to keep the wrapper
    # safe for non-donated inputs.
    out2d = pl.pallas_call(
        kernel,
        out_shape=jax.ShapeDtypeStruct((rows, LANE), orig_dtype),
        grid=grid,
        in_specs=[pl.BlockSpec((block_rows, LANE), lambda i: (i, 0))],
        out_specs=pl.BlockSpec((block_rows, LANE), lambda i: (i, 0)),
        compiler_params=pltpu.CompilerParams(
            dimension_semantics=("parallel",),
            vmem_limit_bytes=32 * 1024 * 1024,
        ),
    )(x2d)

    out_flat = out2d.reshape(-1)
    if padded:
        out_flat = out_flat[:n]
    return out_flat.reshape(orig_shape)


# ----------------------------------------------------------------------------
# Pure-JAX reference (mirrors the PyTorch forward exactly)
# ----------------------------------------------------------------------------
def reference_gelu(x):
    xf = x.astype(jnp.float32)
    return (0.5 * xf * (1.0 + jnp.tanh(
        _SQRT_2_OVER_PI * (xf + _CUBIC_COEF * jnp.power(xf, 3))))).astype(x.dtype)


if __name__ == "__main__":
    key = jax.random.PRNGKey(0)

    # Small shape consistent with the ViT usage of this activation.
    B, C, H, W = 2, 4, 16, 16
    x = jax.random.normal(key, (B, C, H, W), jnp.float32)

    out = jax.block_until_ready(gelu_forward(x))
    assert out.shape == x.shape and out.dtype == x.dtype
    ref = jax.block_until_ready(reference_gelu(x))
    err = float(jnp.max(jnp.abs(out - ref)))
    assert err < 1e-5, f"max abs err {err}"

    # Ragged / non-128-divisible shape exercises the minimal-padding path.
    x2 = jax.random.normal(jax.random.PRNGKey(1), (3, 5, 7), jnp.float32)
    out2 = jax.block_until_ready(gelu_forward(x2))
    ref2 = jax.block_until_ready(reference_gelu(x2))
    err2 = float(jnp.max(jnp.abs(out2 - ref2)))
    assert out2.shape == x2.shape and err2 < 1e-5, f"max abs err {err2}"

    print("KERNEL_OK")
</pallas_src>

<mosaic_0001>
module attributes {stable_mosaic.version = 11 : i64} {
  func.func @_gelu_kernel(%arg0: i32, %arg1: memref<16x128xf32, #tpu.memory_space<vmem>>, %arg2: memref<16x128xf32, #tpu.memory_space<vmem>>) attributes {dimension_semantics = [#tpu.dimension_semantics<parallel>], iteration_bounds = array<i64: 1>, scalar_prefetch = 0 : i64, scratch_operands = 0 : i64, tpu.core_type = #tpu.core_type<tc>, window_params = [{transform_indices = @transform_0, window_bounds = array<i64: 16, 128>}, {transform_indices = @transform_1, window_bounds = array<i64: 16, 128>}]} {
    %c0 = arith.constant 0 : index
    %c0_0 = arith.constant 0 : index
    %0 = vector.load %arg1[%c0, %c0_0] : memref<16x128xf32, #tpu.memory_space<vmem>>, vector<16x128xf32>
    %1 = arith.mulf %0, %0 : vector<16x128xf32>
    %2 = arith.mulf %1, %0 : vector<16x128xf32>
    %cst = arith.constant 4.471500e-02 : f32
    %3 = vector.broadcast %cst : f32 to vector<16x128xf32>
    %4 = arith.mulf %3, %2 : vector<16x128xf32>
    %5 = arith.addf %0, %4 : vector<16x128xf32>
    %cst_1 = arith.constant 0.797884583 : f32
    %6 = vector.broadcast %cst_1 : f32 to vector<16x128xf32>
    %7 = arith.mulf %6, %5 : vector<16x128xf32>
    %cst_2 = arith.constant 5.000000e-01 : f32
    %8 = vector.broadcast %cst_2 : f32 to vector<16x128xf32>
    %9 = arith.mulf %8, %0 : vector<16x128xf32>
    %10 = math.tanh %7 : vector<16x128xf32>
    %cst_3 = arith.constant 1.000000e+00 : f32
    %11 = vector.broadcast %cst_3 : f32 to vector<16x128xf32>
    %12 = arith.addf %11, %10 : vector<16x128xf32>
    %13 = arith.mulf %9, %12 : vector<16x128xf32>
    %c0_4 = arith.constant 0 : index
    %c0_5 = arith.constant 0 : index
    %14 = vector.load %arg2[%c0_4, %c0_5] : memref<16x128xf32, #tpu.memory_space<vmem>>, vector<16x128xf32>
    tpu.vector_store %arg2[%c0_4, %c0_5], %13 {strides = array<i32>} : memref<16x128xf32, #tpu.memory_space<vmem>>, vector<16x128xf32>,
    return
  }
  func.func @transform_0(%arg0: i32) -> (i32, i32) {
    %c0_i32 = arith.constant 0 : i32
    %c0_i32_0 = arith.constant 0 : i32
    return %arg0, %c0_i32 : i32, i32
  }
  func.func @transform_1(%arg0: i32) -> (i32, i32) {
    %c0_i32 = arith.constant 0 : i32
    %c0_i32_0 = arith.constant 0 : i32
    return %arg0, %c0_i32 : i32, i32
  }
}

</mosaic_0001>

<llo_original>
// kernel: tpu_custom_call.1
$region0: #{tpu_custom_call.1}
  #allocation0 [shape = 'u32[]', space=smem, size = 0x4, offset = 0x4, fixed_abs, tag = 'smem constant byte address 0x4 - core index']
  #allocation1 [shape = 'u32[144,128]{1,0:T(1,128)}', space=vmem, size = 0x12000, scoped, tag = 'internal scratch']
  %s0 = inlined_call_operand.hbm [shape: f32[16,128], index: 0, kind: input, shape index: {}]
  %s1 = inlined_call_operand.hbm [shape: f32[16,128], index: 1, kind: output, shape index: {}]
  %s2 = sld [smem:[#allocation0]]
  $region18: #{tpu_custom_call.1} parent=0
    _
  %s4 = ssub.s32 1, %s2
  %s5 = scalar_select 0, %s4, %s2
  $region1: #{tpu_custom_call.1} parent=0
    #allocation2 [shape = 'u8[8192]{0}', space=vmem, size = 0x2000, scoped, tag = 'input window, operand 0, single buffered']
    #allocation3 [shape = 's32[1]{0}', space=sflag, size = 0x4, scoped, tag = 'scoped memory for tpu_custom_call.1']
    #allocation4 [shape = 's32[1]{0}', space=sflag, size = 0x4, scoped, tag = 'scoped memory for tpu_custom_call.1']
    #allocation5 [shape = 'u8[8192]{0}', space=vmem, size = 0x2000, scoped, tag = 'output window, operand 0, single buffered']
    %6 = vsyncpa [#allocation3], 0
    %7 = vsyncpa [#allocation4], 0
    // Predicated region
    $region2: #{tpu_custom_call.1} parent=1 // pred_check
      _
    $region3: #{tpu_custom_call.1} parent=1 // pred_check_branch
      %9 = sbr.rel (0) target = $region5
    $region4: #{tpu_custom_call.1} parent=1 // pred_region
      %s11 = ssub.s32 256, 256
      %12 = vsyncadd [#allocation3], %s11
      %s13 = sshll.u32 [#allocation2], 4
      %s14 = int_to_ptr.vmem [resolvable:$true] %s13
      %19 = dma.hbm_to_vmem [thread:$0]  %s0, 256, %s14, [#allocation3], 128, 128, 8
    $region5: #{tpu_custom_call.1} parent=1 // pred_fallthru
      _
    // Predicated region
    $region6: #{tpu_custom_call.1} parent=1 // pred_check
      _
    $region7: #{tpu_custom_call.1} parent=1 // pred_check_branch
      %21 = sbr.rel (0) target = $region9
    $region8: #{tpu_custom_call.1} parent=1 // pred_region
      %22 = dma.done [#allocation3], 256
    $region9: #{tpu_custom_call.1} parent=1 // pred_fallthru
      _
    %v23 = vld [vmem:[#allocation2] sm:$0xff]
    %v24 = vld [vmem:[#allocation2 + $0x8] sm:$0xff]
    %v25 = vmul.f32 %v23, %v23
    %v26 = vmul.f32 %v24, %v24
    %v27 = vmul.f32 %v25, %v23
    %v28 = vmul.f32 %v26, %v24
    %v29 = vmul.f32 %v27, 0.044715
    %v30 = vmul.f32 %v28, 0.044715
    %v31 = vadd.f32 %v23, %v29
    %v32 = vadd.f32 %v24, %v30
    %v33 = vmul.f32 %v31, 0.7978846
    %v34 = vmul.f32 %v32, 0.7978846
    %v35 = vmul.f32 %v23, 0.5
    %v36 = vmul.f32 %v24, 0.5
    %v37 = vtanh.pop %v33
    %v38 = vtanh.pop %v34
    %v39 = vadd.f32 %v37, 1.0
    %v40 = vadd.f32 %v38, 1.0
    %v41 = vmul.f32 %v35, %v39
    %v42 = vmul.f32 %v36, %v40
    %43 = vst [vmem:[#allocation5] sm:$0xff] %v41
    %44 = vst [vmem:[#allocation5 + $0x8] sm:$0xff] %v42
    // Predicated region
    $region10: #{tpu_custom_call.1} parent=1 // pred_check
      _
    $region11: #{tpu_custom_call.1} parent=1 // pred_check_branch
      %46 = sbr.rel (0) target = $region13
    $region12: #{tpu_custom_call.1} parent=1 // pred_region
      %s48 = ssub.s32 256, 256
      %49 = vsyncadd [#allocation4], %s48
      %s50 = sshll.u32 [#allocation5], 4
      %s51 = int_to_ptr.vmem [resolvable:$true] %s50
      %56 = dma.vmem_to_hbm [thread:$0]  %s51, 256, %s1, [#allocation4], 128, 128, 8
    $region13: #{tpu_custom_call.1} parent=1 // pred_fallthru
      _
    // Predicated region
    $region14: #{tpu_custom_call.1} parent=1 // pred_check
      _
    $region15: #{tpu_custom_call.1} parent=1 // pred_check_branch
      %58 = sbr.rel (0) target = $region17
    $region16: #{tpu_custom_call.1} parent=1 // pred_region
      %59 = dma.done [#allocation4], 256
    $region17: #{tpu_custom_call.1} parent=1 // pred_fallthru
      _
    %60 = vsyncpa [#allocation3], 1
    %61 = vsyncpa [#allocation4], 1

</llo_original>
